<compile_context>
chip_gen: v7x
topology: tpu7x:2x2x1
jax: 0.10.0
libtpu: 0.0.40
codegen_flags: <defaults>
</compile_context>

<pallas_src>
import functools
import math
import string

import jax
import jax.numpy as jnp
from jax import lax
from jax.experimental import pallas as pl
from jax.experimental.pallas import tpu as pltpu


def _rnn_infer_kernel(idx_ref,            # (T,) int32, SMEM
                      h0_ref,             # (1, H) f32, VMEM
                      wx_ref,             # (i_pad, H+o_pad) f32, VMEM  (bias folded in)
                      wh_ref,             # (H, H+o_pad) bf16, VMEM
                      out_ref,            # (1, o_pad) f32 — padded log-probs (lane-dense)
                      hT_ref,             # (1, H) f32 — final hidden
                      *, seq_len, hidden_size, output_size, o_pad, i_pad):
    H = hidden_size

    # Loop-invariant weights: load to vregs once (16 bf16 vregs), reuse every step.
    wh = wh_ref[...]                                           # (H, H+o_pad) bf16

    def step(t, carry):
        h, _ = carry                                           # (1, H) f32 in vregs
        i = idx_ref[t]                                         # scalar SMEM load
        i = jnp.minimum(jnp.maximum(i, 0), i_pad - 1)          # safety clamp (no OOB)
        # one-hot x @ [Wxh | Wxo] + [bh | bo]  ==  row i of the bias-folded table
        x_row = wx_ref[pl.ds(i, 1), :]                         # (1, H+o_pad) f32
        # h @ [Whh | Who_pad]: one lane-dense bf16 MXU pass, f32 accumulation
        h_proj = jnp.dot(h.astype(jnp.bfloat16), wh,
                         preferred_element_type=jnp.float32)   # (1, H+o_pad) f32
        combined = x_row + h_proj                              # (1, H+o_pad) f32
        return combined[:, :H], combined[:, H:]

    init = (h0_ref[...].astype(jnp.float32),
            jnp.zeros((1, o_pad), jnp.float32))
    h_fin, logits_pad = lax.fori_loop(0, seq_len, step, init, unroll=True)

    hT_ref[...] = h_fin.astype(hT_ref.dtype)

    # log_softmax over the real O lanes; padded lanes masked to -inf so the
    # (1, o_pad) store stays lane-dense (wrapper slices to O).
    lane = lax.broadcasted_iota(jnp.int32, (1, o_pad), 1)
    masked = jnp.where(lane < output_size, logits_pad, -jnp.inf)
    m = jnp.max(masked, axis=1, keepdims=True)
    s = masked - m
    lse = jnp.log(jnp.sum(jnp.exp(s), axis=1, keepdims=True))
    out_ref[...] = (s - lse).astype(out_ref.dtype)


def make_rnn_net(input_size, hidden_size, output_size, key):
    """Builds deterministic parameters (PyTorch nn.Linear-style init) and returns
    (infer_fn, raw_params).  infer_fn(letter_idx:(T,) int32, h0:(1,H)) ->
    (log_probs:(1,O), final_hidden:(1,H)) — the whole per-letter loop runs
    inside one grid-less Pallas kernel."""
    combined = input_size + hidden_size
    k1, k2, k3, k4 = jax.random.split(key, 4)
    bound = 1.0 / math.sqrt(combined)

    # Stored as (in_features, out_features), i.e. transposed vs torch's (out, in).
    w_i2h = jax.random.uniform(k1, (combined, hidden_size), jnp.float32, -bound, bound)
    b_i2h = jax.random.uniform(k2, (1, hidden_size), jnp.float32, -bound, bound)
    w_i2o = jax.random.uniform(k3, (combined, output_size), jnp.float32, -bound, bound)
    b_i2o = jax.random.uniform(k4, (1, output_size), jnp.float32, -bound, bound)

    # cat([x, h], 1) @ W  ==  x @ W[:I] + h @ W[I:]  (split, never concat on lanes)
    wxh, whh = w_i2h[:input_size], w_i2h[input_size:]
    wxo, who = w_i2o[:input_size], w_i2o[input_size:]

    H, O = hidden_size, output_size
    o_pad = ((O + 127) // 128) * 128          # lane-dense packed output block
    i_pad = ((input_size + 7) // 8) * 8       # sublane-friendly row count
    cols = H + o_pad

    # Packed bias [bh | bo | 0-pad], f32.
    b_cat = jnp.zeros((1, cols), jnp.float32)
    b_cat = b_cat.at[:, :H].set(b_i2h)
    b_cat = b_cat.at[:, H:H + O].set(b_i2o)

    # Packed x-weight table (one-hot matmul == row select), with bias folded into
    # every row (including the i_pad padding rows, so any clamped index still
    # behaves like a zero one-hot + bias).
    wx_cat = jnp.zeros((i_pad, cols), jnp.float32)
    wx_cat = wx_cat.at[:input_size, :H].set(wxh)
    wx_cat = wx_cat.at[:input_size, H:H + O].set(wxo)
    wx_cat = wx_cat + b_cat                    # fold bias (exact f32 add)

    # Packed hidden-path weights [Whh | Who | 0-pad], bf16 for the MXU.
    wh_cat = jnp.zeros((H, cols), jnp.float32)
    wh_cat = wh_cat.at[:, :H].set(whh)
    wh_cat = wh_cat.at[:, H:H + O].set(who)
    wh_cat = wh_cat.astype(jnp.bfloat16)

    @jax.jit
    def infer(letter_idx, h0):
        T = letter_idx.shape[0]               # static under jit
        kernel = functools.partial(_rnn_infer_kernel,
                                   seq_len=T, hidden_size=H, output_size=O,
                                   o_pad=o_pad, i_pad=i_pad)
        out_pad, hT = pl.pallas_call(
            kernel,
            out_shape=(jax.ShapeDtypeStruct((1, o_pad), jnp.float32),
                       jax.ShapeDtypeStruct((1, H), jnp.float32)),
            in_specs=[
                pl.BlockSpec(memory_space=pltpu.MemorySpace.SMEM),   # letter_idx
                pl.BlockSpec(memory_space=pltpu.MemorySpace.VMEM),   # h0
                pl.BlockSpec(memory_space=pltpu.MemorySpace.VMEM),   # wx_cat (+bias)
                pl.BlockSpec(memory_space=pltpu.MemorySpace.VMEM),   # wh_cat
            ],
            out_specs=(pl.BlockSpec(memory_space=pltpu.MemorySpace.VMEM),
                       pl.BlockSpec(memory_space=pltpu.MemorySpace.VMEM)),
        )(letter_idx, h0, wx_cat, wh_cat)
        return out_pad[:, :O], hT             # slice padded logits to O host-side

    params = dict(wxh=wxh, whh=whh, bh=b_i2h, wxo=wxo, who=who, bo=b_i2o)
    return infer, params


def reference_infer(letter_ids, h0, params):
    """Pure-JAX reference with the same bf16 hidden-path matmul quantization."""
    whh_bf = params["whh"].astype(jnp.bfloat16)
    who_bf = params["who"].astype(jnp.bfloat16)
    h = h0
    out = None
    for i in letter_ids:
        # x is one-hot, so x @ W == row i of W (exact).
        hh = jnp.dot(h.astype(jnp.bfloat16), whh_bf, preferred_element_type=jnp.float32)
        ho = jnp.dot(h.astype(jnp.bfloat16), who_bf, preferred_element_type=jnp.float32)
        new_h = params["wxh"][i:i + 1, :] + hh + params["bh"]
        logits = params["wxo"][i:i + 1, :] + ho + params["bo"]
        out = jax.nn.log_softmax(logits, axis=1)
        h = new_h
    return out, h


def name_to_indices(name, alphabet):
    # Matches torch `rep[index][0][all_letters.find(letter)] = 1` semantics:
    # find() == -1 wraps to the last letter under torch indexing.
    return [alphabet.find(c) % len(alphabet) for c in name]


if __name__ == "__main__":
    all_letters = string.ascii_letters + '.,;'
    n_letters = len(all_letters)        # 55  -> input_size
    n_hidden = 128                      # hidden_size (matches module default)
    n_languages = 16                    # output_size (small synthetic choice; spec's list is empty)

    key = jax.random.PRNGKey(0)
    infer_fn, params = make_rnn_net(n_letters, n_hidden, n_languages, key)

    # Emulate `infer(net, 'Adam')`: letter indices, per-letter loop fused in-kernel.
    name = "Adam"
    letter_ids = name_to_indices(name, all_letters)
    idx = jnp.asarray(letter_ids, dtype=jnp.int32)
    h0 = jnp.zeros((1, n_hidden), jnp.float32)      # net.init_hidden()

    out, hT = infer_fn(idx, h0)
    out = jax.block_until_ready(out)
    hT = jax.block_until_ready(hT)

    assert out.shape == (1, n_languages)
    assert hT.shape == (1, n_hidden)
    # log-softmax rows must sum to ~1 in probability space
    assert jnp.allclose(jnp.sum(jnp.exp(out), axis=1), 1.0, atol=1e-5)

    ref_out, ref_h = reference_infer(letter_ids, h0, params)
    assert jnp.allclose(out, ref_out, atol=2e-3), float(jnp.max(jnp.abs(out - ref_out)))
    assert jnp.allclose(hT, ref_h, atol=2e-3), float(jnp.max(jnp.abs(hT - ref_h)))

    print("KERNEL_OK")
</pallas_src>

<mosaic_0001>
module attributes {stable_mosaic.version = 11 : i64} {
  func.func @_rnn_infer_kernel(%arg0: memref<4xi32, #tpu.memory_space<smem>>, %arg1: memref<1x128xf32, #tpu.memory_space<vmem>>, %arg2: memref<56x256xf32, #tpu.memory_space<vmem>>, %arg3: memref<128x256xbf16, #tpu.memory_space<vmem>>, %arg4: memref<1x128xf32, #tpu.memory_space<vmem>>, %arg5: memref<1x128xf32, #tpu.memory_space<vmem>>) attributes {dimension_semantics = [], scalar_prefetch = 0 : i64, scratch_operands = 0 : i64, tpu.core_type = #tpu.core_type<tc>} {
    %c0 = arith.constant 0 : index
    %c0_0 = arith.constant 0 : index
    %0 = vector.load %arg3[%c0, %c0_0] : memref<128x256xbf16, #tpu.memory_space<vmem>>, vector<128x256xbf16>
    %c0_1 = arith.constant 0 : index
    %c0_2 = arith.constant 0 : index
    %1 = vector.load %arg1[%c0_1, %c0_2] : memref<1x128xf32, #tpu.memory_space<vmem>>, vector<1x128xf32>
    %cst = arith.constant 0.000000e+00 : f32
    %2 = vector.broadcast %cst : f32 to vector<1x128xf32>
    %c0_i32 = arith.constant 0 : i32
    %3 = arith.index_cast %c0_i32 : i32 to index
    %4 = memref.load %arg0[%3] : memref<4xi32, #tpu.memory_space<smem>>
    %c0_i32_3 = arith.constant 0 : i32
    %5 = arith.maxsi %4, %c0_i32_3 : i32
    %c55_i32 = arith.constant 55 : i32
    %6 = arith.minsi %5, %c55_i32 : i32
    %7 = arith.index_cast %6 : i32 to index
    %c0_4 = arith.constant 0 : index
    %8 = vector.load %arg2[%7, %c0_4] : memref<56x256xf32, #tpu.memory_space<vmem>>, vector<1x256xf32>
    %9 = arith.truncf %1 : vector<1x128xf32> to vector<1x128xbf16>
    %cst_5 = arith.constant dense<0.000000e+00> : vector<1x256xf32>
    %10 = tpu.matmul %9, %0, %cst_5 {dimension_numbers = #tpu.dot_dimension_numbers<[1], [0], [0], [1], [0, 0, 1, 1], [], []>} : vector<1x128xbf16>, vector<128x256xbf16>, vector<1x256xf32> -> vector<1x256xf32>
    %11 = arith.addf %8, %10 : vector<1x256xf32>
    %12 = vector.extract_strided_slice %11 {offsets = [0, 0], sizes = [1, 128], strides = [1, 1]} : vector<1x256xf32> to vector<1x128xf32>
    %13 = vector.extract_strided_slice %11 {offsets = [0, 128], sizes = [1, 128], strides = [1, 1]} : vector<1x256xf32> to vector<1x128xf32>
    %c1_i32 = arith.constant 1 : i32
    %14 = arith.index_cast %c1_i32 : i32 to index
    %15 = memref.load %arg0[%14] : memref<4xi32, #tpu.memory_space<smem>>
    %c0_i32_6 = arith.constant 0 : i32
    %16 = arith.maxsi %15, %c0_i32_6 : i32
    %c55_i32_7 = arith.constant 55 : i32
    %17 = arith.minsi %16, %c55_i32_7 : i32
    %18 = arith.index_cast %17 : i32 to index
    %c0_8 = arith.constant 0 : index
    %19 = vector.load %arg2[%18, %c0_8] : memref<56x256xf32, #tpu.memory_space<vmem>>, vector<1x256xf32>
    %20 = arith.truncf %12 : vector<1x128xf32> to vector<1x128xbf16>
    %cst_9 = arith.constant dense<0.000000e+00> : vector<1x256xf32>
    %21 = tpu.matmul %20, %0, %cst_9 {dimension_numbers = #tpu.dot_dimension_numbers<[1], [0], [0], [1], [0, 0, 1, 1], [], []>} : vector<1x128xbf16>, vector<128x256xbf16>, vector<1x256xf32> -> vector<1x256xf32>
    %22 = arith.addf %19, %21 : vector<1x256xf32>
    %23 = vector.extract_strided_slice %22 {offsets = [0, 0], sizes = [1, 128], strides = [1, 1]} : vector<1x256xf32> to vector<1x128xf32>
    %24 = vector.extract_strided_slice %22 {offsets = [0, 128], sizes = [1, 128], strides = [1, 1]} : vector<1x256xf32> to vector<1x128xf32>
    %c2_i32 = arith.constant 2 : i32
    %25 = arith.index_cast %c2_i32 : i32 to index
    %26 = memref.load %arg0[%25] : memref<4xi32, #tpu.memory_space<smem>>
    %c0_i32_10 = arith.constant 0 : i32
    %27 = arith.maxsi %26, %c0_i32_10 : i32
    %c55_i32_11 = arith.constant 55 : i32
    %28 = arith.minsi %27, %c55_i32_11 : i32
    %29 = arith.index_cast %28 : i32 to index
    %c0_12 = arith.constant 0 : index
    %30 = vector.load %arg2[%29, %c0_12] : memref<56x256xf32, #tpu.memory_space<vmem>>, vector<1x256xf32>
    %31 = arith.truncf %23 : vector<1x128xf32> to vector<1x128xbf16>
    %cst_13 = arith.constant dense<0.000000e+00> : vector<1x256xf32>
    %32 = tpu.matmul %31, %0, %cst_13 {dimension_numbers = #tpu.dot_dimension_numbers<[1], [0], [0], [1], [0, 0, 1, 1], [], []>} : vector<1x128xbf16>, vector<128x256xbf16>, vector<1x256xf32> -> vector<1x256xf32>
    %33 = arith.addf %30, %32 : vector<1x256xf32>
    %34 = vector.extract_strided_slice %33 {offsets = [0, 0], sizes = [1, 128], strides = [1, 1]} : vector<1x256xf32> to vector<1x128xf32>
    %35 = vector.extract_strided_slice %33 {offsets = [0, 128], sizes = [1, 128], strides = [1, 1]} : vector<1x256xf32> to vector<1x128xf32>
    %c3_i32 = arith.constant 3 : i32
    %36 = arith.index_cast %c3_i32 : i32 to index
    %37 = memref.load %arg0[%36] : memref<4xi32, #tpu.memory_space<smem>>
    %c0_i32_14 = arith.constant 0 : i32
    %38 = arith.maxsi %37, %c0_i32_14 : i32
    %c55_i32_15 = arith.constant 55 : i32
    %39 = arith.minsi %38, %c55_i32_15 : i32
    %40 = arith.index_cast %39 : i32 to index
    %c0_16 = arith.constant 0 : index
    %41 = vector.load %arg2[%40, %c0_16] : memref<56x256xf32, #tpu.memory_space<vmem>>, vector<1x256xf32>
    %42 = arith.truncf %34 : vector<1x128xf32> to vector<1x128xbf16>
    %cst_17 = arith.constant dense<0.000000e+00> : vector<1x256xf32>
    %43 = tpu.matmul %42, %0, %cst_17 {dimension_numbers = #tpu.dot_dimension_numbers<[1], [0], [0], [1], [0, 0, 1, 1], [], []>} : vector<1x128xbf16>, vector<128x256xbf16>, vector<1x256xf32> -> vector<1x256xf32>
    %44 = arith.addf %41, %43 : vector<1x256xf32>
    %45 = vector.extract_strided_slice %44 {offsets = [0, 0], sizes = [1, 128], strides = [1, 1]} : vector<1x256xf32> to vector<1x128xf32>
    %46 = vector.extract_strided_slice %44 {offsets = [0, 128], sizes = [1, 128], strides = [1, 1]} : vector<1x256xf32> to vector<1x128xf32>
    %c4_i32 = arith.constant 4 : i32
    %c0_18 = arith.constant 0 : index
    %c0_19 = arith.constant 0 : index
    %47 = vector.load %arg5[%c0_18, %c0_19] : memref<1x128xf32, #tpu.memory_space<vmem>>, vector<1x128xf32>
    tpu.vector_store %arg5[%c0_18, %c0_19], %45 {strides = array<i32>} : memref<1x128xf32, #tpu.memory_space<vmem>>, vector<1x128xf32>,
    %48 = tpu.iota {dimensions = array<i32: 1>} : vector<1x128xi32>
    %c16_i32 = arith.constant 16 : i32
    %49 = vector.broadcast %c16_i32 : i32 to vector<1x128xi32>
    %50 = arith.cmpi slt, %48, %49 : vector<1x128xi32>
    %cst_20 = arith.constant 0xFF800000 : f32
    %51 = vector.broadcast %cst_20 : f32 to vector<1x128xf32>
    %52 = arith.select %50, %46, %51 : vector<1x128xi1>, vector<1x128xf32>
    %cst_21 = arith.constant dense<0xFF800000> : vector<1xf32>
    %53 = vector.multi_reduction <maximumf>, %52, %cst_21 [1] : vector<1x128xf32> to vector<1xf32>
    %54 = vector.shape_cast %53 : vector<1xf32> to vector<1x1xf32>
    %55 = vector.broadcast %54 : vector<1x1xf32> to vector<1x128xf32>
    %56 = arith.subf %52, %55 : vector<1x128xf32>
    %57 = math.exp %56 : vector<1x128xf32>
    %cst_22 = arith.constant dense<0.000000e+00> : vector<1xf32>
    %58 = vector.multi_reduction <add>, %57, %cst_22 [1] : vector<1x128xf32> to vector<1xf32>
    %59 = vector.shape_cast %58 : vector<1xf32> to vector<1x1xf32>
    %60 = math.log %59 : vector<1x1xf32>
    %61 = vector.broadcast %60 : vector<1x1xf32> to vector<1x128xf32>
    %62 = arith.subf %56, %61 : vector<1x128xf32>
    %c0_23 = arith.constant 0 : index
    %c0_24 = arith.constant 0 : index
    %63 = vector.load %arg4[%c0_23, %c0_24] : memref<1x128xf32, #tpu.memory_space<vmem>>, vector<1x128xf32>
    tpu.vector_store %arg4[%c0_23, %c0_24], %62 {strides = array<i32>} : memref<1x128xf32, #tpu.memory_space<vmem>>, vector<1x128xf32>,
    return
  }
}

</mosaic_0001>

<llo_original>
// kernel: infer.1
$region0: #{infer.1}
  #allocation0 [shape = 'u32[]', space=smem, size = 0x4, offset = 0x4, fixed_abs, tag = 'smem constant byte address 0x4 - core index']
  #allocation1 [shape = 'u32[144,128]{1,0:T(1,128)}', space=vmem, size = 0x12000, scoped, tag = 'internal scratch']
  %s0 = inlined_call_operand.vmem [shape: s32[4], index: 0, kind: input, shape index: {}]
  %s1 = inlined_call_operand.vmem [shape: f32[1,128], index: 1, kind: input, shape index: {}]
  %s2 = inlined_call_operand.vmem [shape: f32[56,256], index: 2, kind: input, shape index: {}]
  %s3 = inlined_call_operand.vmem [shape: bf16[128,256], index: 3, kind: input, shape index: {}]
  %s4 = inlined_call_operand.hbm [shape: f32[1,128], index: 4, kind: output, shape index: {0}]
  %s5 = inlined_call_operand.hbm [shape: f32[1,128], index: 5, kind: output, shape index: {1}]
  %6 = xla_tuple %s4, %s5
  %s7 = sld [smem:[#allocation0]]
  $region38: #{infer.1} parent=0
    _
  %s9 = ssub.s32 1, %s7
  %s10 = scalar_select 0, %s9, %s7
  $region1: #{infer.1} parent=0
    #allocation2 [shape = 'u8[512]{0}', space=smem, size = 0x200, scoped, tag = 'input window, operand 0, single buffered']
    #allocation3 [shape = 's32[1]{0}', space=sflag, size = 0x4, scoped, tag = 'scoped memory for infer.1']
    #allocation4 [shape = 's32[1]{0}', space=sflag, size = 0x4, scoped, tag = 'scoped memory for infer.1']
    #allocation5 [shape = 'u8[512]{0}', space=vmem, size = 0x400, scoped, tag = 'output window, operand 0, single buffered']
    #allocation6 [shape = 'u8[512]{0}', space=vmem, size = 0x400, scoped, tag = 'output window, operand 1, single buffered']
    #allocation7 [shape = 's32[1]{0}', space=sflag, size = 0x4, scoped, tag = 'scoped memory for infer.1']
    %11 = vsyncpa [#allocation4], 0
    %12 = vsyncpa [#allocation3], 0
    %13 = vsyncpa [#allocation7], 0
    // Predicated region
    $region2: #{infer.1} parent=1 // pred_check
      _
    $region3: #{infer.1} parent=1 // pred_check_branch
      %15 = sbr.rel (0) target = $region5
    $region4: #{infer.1} parent=1 // pred_region
      %s17 = ssub.s32 16, 16
      %18 = vsyncadd [#allocation4], %s17
      %s20 = sshll.u32 %s0, 4
      %s21 = int_to_ptr.vmem [resolvable:$true] %s20
      %23 = dma.vmem_to_smem %s21, 16, [#allocation2], [#allocation4]
    $region5: #{infer.1} parent=1 // pred_fallthru
      _
    // Predicated region
    $region6: #{infer.1} parent=1 // pred_check
      _
    $region7: #{infer.1} parent=1 // pred_check_branch
      %25 = sbr.rel (0) target = $region9
    $region8: #{infer.1} parent=1 // pred_region
      _
    $region9: #{infer.1} parent=1 // pred_fallthru
      _
    // Predicated region
    $region10: #{infer.1} parent=1 // pred_check
      _
    $region11: #{infer.1} parent=1 // pred_check_branch
      %27 = sbr.rel (0) target = $region13
    $region12: #{infer.1} parent=1 // pred_region
      _
    $region13: #{infer.1} parent=1 // pred_fallthru
      _
    // Predicated region
    $region14: #{infer.1} parent=1 // pred_check
      _
    $region15: #{infer.1} parent=1 // pred_check_branch
      %29 = sbr.rel (0) target = $region17
    $region16: #{infer.1} parent=1 // pred_region
      _
    $region17: #{infer.1} parent=1 // pred_fallthru
      _
    // Predicated region
    $region18: #{infer.1} parent=1 // pred_check
      _
    $region19: #{infer.1} parent=1 // pred_check_branch
      %31 = sbr.rel (0) target = $region21
    $region20: #{infer.1} parent=1 // pred_region
      %32 = dma.done [#allocation4], 16
    $region21: #{infer.1} parent=1 // pred_fallthru
      _
    %33 = sfence
    %v35 = vld [vmem:[%s3] sm:$0xff]
    %v36 = vld [vmem:[%s3 + $0x8] sm:$0xff]
    %v37 = vld [vmem:[%s3 + $0x10] sm:$0xff]
    %v38 = vld [vmem:[%s3 + $0x18] sm:$0xff]
    %v39 = vld [vmem:[%s3 + $0x20] sm:$0xff]
    %v40 = vld [vmem:[%s3 + $0x28] sm:$0xff]
    %v41 = vld [vmem:[%s3 + $0x30] sm:$0xff]
    %v42 = vld [vmem:[%s3 + $0x38] sm:$0xff]
    %v43 = vld [vmem:[%s3 + $0x40] sm:$0xff]
    %v44 = vld [vmem:[%s3 + $0x48] sm:$0xff]
    %v45 = vld [vmem:[%s3 + $0x50] sm:$0xff]
    %v46 = vld [vmem:[%s3 + $0x58] sm:$0xff]
    %v47 = vld [vmem:[%s3 + $0x60] sm:$0xff]
    %v48 = vld [vmem:[%s3 + $0x68] sm:$0xff]
    %v49 = vld [vmem:[%s3 + $0x70] sm:$0xff]
    %v50 = vld [vmem:[%s3 + $0x78] sm:$0xff]
    %v51 = vld [vmem:[%s1] sm:$0x1]
    %s52 = sld [smem:[#allocation2]]
    %p53 = scmp.gt.s32.totalorder %s52, 0
    %s54 = scalar_select %p53, %s52, 0
    %p55 = scmp.lt.s32.totalorder %s54, 55
    %s56 = scalar_select %p55, %s54, 55
    %s57 = sshra.s32 %s56, 3
    %s58 = sand.u32 %s56, 7
    %s59 = sshra.s32 %s56, 3
    %s60 = sand.u32 %s56, 7
    %s61 = smul.u32 %s57, 2
    %s62 = smul.u32 %s61, 8
    %s63 = sadd.s32 %s62, %s60
    %s64 = scalar_lea.vmem %s2, %s63
    %v65 = vld [vmem:[%s64] ss:$8 sm:$0x3]
    %v66 = vpack.c.bf16 %v51, %v51
    %v83 = vunpack.c.l.b16 %v35
    %v84 = vunpack.c.h.b16 %v35
    %v85 = vunpack.c.l.b16 %v36
    %v86 = vunpack.c.h.b16 %v36
    %v87 = vunpack.c.l.b16 %v37
    %v88 = vunpack.c.h.b16 %v37
    %v89 = vunpack.c.l.b16 %v38
    %v90 = vunpack.c.h.b16 %v38
    %v91 = vunpack.c.l.b16 %v39
    %v92 = vunpack.c.h.b16 %v39
    %v93 = vunpack.c.l.b16 %v40
    %v94 = vunpack.c.h.b16 %v40
    %v95 = vunpack.c.l.b16 %v41
    %v96 = vunpack.c.h.b16 %v41
    %v97 = vunpack.c.l.b16 %v42
    %v98 = vunpack.c.h.b16 %v42
    %v99 = vunpack.c.l.b16 %v43
    %v100 = vunpack.c.h.b16 %v43
    %v101 = vunpack.c.l.b16 %v44
    %v102 = vunpack.c.h.b16 %v44
    %v103 = vunpack.c.l.b16 %v45
    %v104 = vunpack.c.h.b16 %v45
    %v105 = vunpack.c.l.b16 %v46
    %v106 = vunpack.c.h.b16 %v46
    %v107 = vunpack.c.l.b16 %v47
    %v108 = vunpack.c.h.b16 %v47
    %v109 = vunpack.c.l.b16 %v48
    %v110 = vunpack.c.h.b16 %v48
    %v111 = vunpack.c.l.b16 %v49
    %v112 = vunpack.c.h.b16 %v49
    %v113 = vunpack.c.l.b16 %v50
    %v114 = vunpack.c.h.b16 %v50
    %v115 = vpack.c.b16 %v85, %v83
    %v116 = vpack.c.b16 %v86, %v84
    %v117 = vpack.c.b16 %v89, %v87
    %v118 = vpack.c.b16 %v90, %v88
    %v119 = vpack.c.b16 %v93, %v91
    %v120 = vpack.c.b16 %v94, %v92
    %v121 = vpack.c.b16 %v97, %v95
    %v122 = vpack.c.b16 %v98, %v96
    %v123 = vpack.c.b16 %v101, %v99
    %v124 = vpack.c.b16 %v102, %v100
    %v125 = vpack.c.b16 %v105, %v103
    %v126 = vpack.c.b16 %v106, %v104
    %v127 = vpack.c.b16 %v109, %v107
    %v128 = vpack.c.b16 %v110, %v108
    %v129 = vpack.c.b16 %v113, %v111
    %v130 = vpack.c.b16 %v114, %v112
    %147 = vmatprep.subr.bf16.mxu0 %v116
    %148 = vmatpush1.bf16.msra.mxu0 %v115
    %149 = vmatprep.subr.bf16.mxu0 %v118
    %150 = vmatpush1.bf16.msra.mxu0 %v117
    %151 = vmatprep.subr.bf16.mxu0 %v120
    %152 = vmatpush1.bf16.msra.mxu0 %v119
    %153 = vmatprep.subr.bf16.mxu0 %v122
    %154 = vmatpush1.bf16.msra.mxu0 %v121
    %155 = vmatprep.subr.bf16.mxu0 %v124
    %156 = vmatpush1.bf16.msra.mxu0 %v123
    %157 = vmatprep.subr.bf16.mxu0 %v126
    %158 = vmatpush1.bf16.msra.mxu0 %v125
    %159 = vmatprep.subr.bf16.mxu0 %v128
    %160 = vmatpush1.bf16.msra.mxu0 %v127
    %161 = vmatprep.subr.bf16.mxu0 %v130
    %162 = vmatpush1.bf16.msra.mxu0 %v129
    %163 = vmatprep.subr.bf16.mxu0 0
    %164 = vmatpush1.bf16.msra.mxu0 0
    %165 = vmatprep.subr.bf16.mxu0 0
    %166 = vmatpush1.bf16.msra.mxu0 0
    %167 = vmatprep.subr.bf16.mxu0 0
    %168 = vmatpush1.bf16.msra.mxu0 0
    %169 = vmatprep.subr.bf16.mxu0 0
    %170 = vmatpush1.bf16.msra.mxu0 0
    %171 = vmatprep.subr.bf16.mxu0 0
    %172 = vmatpush1.bf16.msra.mxu0 0
    %173 = vmatprep.subr.bf16.mxu0 0
    %174 = vmatpush1.bf16.msra.mxu0 0
    %175 = vmatprep.subr.bf16.mxu0 0
    %176 = vmatpush1.bf16.msra.mxu0 0
    %177 = vmatprep.subr.bf16.mxu0 0
    %178 = vmatpush1.bf16.msra.mxu0 0
    %179 = vmatprep.mubr.bf16.mxu0 0
    %180 = vmatmul.mubr.bf16.gmra.mrb[0].mxu0 %v66
    %v181 = vpop.f32.mrb[0].mxu0
    %v182 = vadd.f32 0.0, %v181
    %v183 = vpop.f32.mrb[0].mxu0
    %v184 = vadd.f32 0.0, %v183
    %v185 = vpop.f32.mrb[0].mxu0
    %v186 = vpop.f32.mrb[0].mxu0
    %187 = vdwg.mxu0
    %v190 = vcombine.low %v182, %v184
    %v192 = vunpack.c.l.s4 1966171168
    %v193 = vunpack.c.0.s8 %v192
    %v194 = vlaneseq
    %v195 = vshrl.u32 %v194, 7
    %v196 = vsub.s32 %v193, %v195
    %v197 = vrot.slane %v190, %v196
    %v199 = vunpack.c.l.s4 1966171168
    %v200 = vunpack.c.0.s8 %v199
    %v201 = vlaneseq
    %v202 = vshrl.u32 %v201, 7
    %v203 = vsub.s32 %v200, %v202
    %v204 = vrot.slane %v197, %v203
    %v206 = vadd.f32 %v65, %v204
    %s207 = sld [smem:[#allocation2 + $0x1]]
    %p208 = scmp.gt.s32.totalorder %s207, 0
    %s209 = scalar_select %p208, %s207, 0
    %p210 = scmp.lt.s32.totalorder %s209, 55
    %s211 = scalar_select %p210, %s209, 55
    %s212 = sshra.s32 %s211, 3
    %s213 = sand.u32 %s211, 7
    %s214 = sshra.s32 %s211, 3
    %s215 = sand.u32 %s211, 7
    %s216 = smul.u32 %s212, 2
    %s217 = smul.u32 %s216, 8
    %s218 = sadd.s32 %s217, %s215
    %s219 = scalar_lea.vmem %s2, %s218
    %v220 = vld [vmem:[%s219] ss:$8 sm:$0x3]
    %v221 = vpack.c.bf16 %v206, %v206
    %222 = vmatprep.subr.bf16.mxu0 %v116
    %223 = vmatpush1.bf16.msra.mxu0 %v115
    %224 = vmatprep.subr.bf16.mxu0 %v118
    %225 = vmatpush1.bf16.msra.mxu0 %v117
    %226 = vmatprep.subr.bf16.mxu0 %v120
    %227 = vmatpush1.bf16.msra.mxu0 %v119
    %228 = vmatprep.subr.bf16.mxu0 %v122
    %229 = vmatpush1.bf16.msra.mxu0 %v121
    %230 = vmatprep.subr.bf16.mxu0 %v124
    %231 = vmatpush1.bf16.msra.mxu0 %v123
    %232 = vmatprep.subr.bf16.mxu0 %v126
    %233 = vmatpush1.bf16.msra.mxu0 %v125
    %234 = vmatprep.subr.bf16.mxu0 %v128
    %235 = vmatpush1.bf16.msra.mxu0 %v127
    %236 = vmatprep.subr.bf16.mxu0 %v130
    %237 = vmatpush1.bf16.msra.mxu0 %v129
    %238 = vmatprep.subr.bf16.mxu0 0
    %239 = vmatpush1.bf16.msra.mxu0 0
    %240 = vmatprep.subr.bf16.mxu0 0
    %241 = vmatpush1.bf16.msra.mxu0 0
    %242 = vmatprep.subr.bf16.mxu0 0
    %243 = vmatpush1.bf16.msra.mxu0 0
    %244 = vmatprep.subr.bf16.mxu0 0
    %245 = vmatpush1.bf16.msra.mxu0 0
    %246 = vmatprep.subr.bf16.mxu0 0
    %247 = vmatpush1.bf16.msra.mxu0 0
    %248 = vmatprep.subr.bf16.mxu0 0
    %249 = vmatpush1.bf16.msra.mxu0 0
    %250 = vmatprep.subr.bf16.mxu0 0
    %251 = vmatpush1.bf16.msra.mxu0 0
    %252 = vmatprep.subr.bf16.mxu0 0
    %253 = vmatpush1.bf16.msra.mxu0 0
    %254 = vmatprep.mubr.bf16.mxu0 0
    %255 = vmatmul.mubr.bf16.gmra.mrb[0].mxu0 %v221
    %v256 = vpop.f32.mrb[0].mxu0
    %v257 = vadd.f32 0.0, %v256
    %v258 = vpop.f32.mrb[0].mxu0
    %v259 = vadd.f32 0.0, %v258
    %v260 = vpop.f32.mrb[0].mxu0
    %v261 = vpop.f32.mrb[0].mxu0
    %262 = vdwg.mxu0
    %v265 = vcombine.low %v257, %v259
    %v267 = vunpack.c.l.s4 1966171168
    %v268 = vunpack.c.0.s8 %v267
    %v269 = vlaneseq
    %v270 = vshrl.u32 %v269, 7
    %v271 = vsub.s32 %v268, %v270
    %v272 = vrot.slane %v265, %v271
    %v274 = vunpack.c.l.s4 1966171168
    %v275 = vunpack.c.0.s8 %v274
    %v276 = vlaneseq
    %v277 = vshrl.u32 %v276, 7
    %v278 = vsub.s32 %v275, %v277
    %v279 = vrot.slane %v272, %v278
    %v281 = vadd.f32 %v220, %v279
    %s282 = sld [smem:[#allocation2 + $0x2]]
    %p283 = scmp.gt.s32.totalorder %s282, 0
    %s284 = scalar_select %p283, %s282, 0
    %p285 = scmp.lt.s32.totalorder %s284, 55
    %s286 = scalar_select %p285, %s284, 55
    %s287 = sshra.s32 %s286, 3
    %s288 = sand.u32 %s286, 7
    %s289 = sshra.s32 %s286, 3
    %s290 = sand.u32 %s286, 7
    %s291 = smul.u32 %s287, 2
    %s292 = smul.u32 %s291, 8
    %s293 = sadd.s32 %s292, %s290
    %s294 = scalar_lea.vmem %s2, %s293
    %v295 = vld [vmem:[%s294] ss:$8 sm:$0x3]
    %v296 = vpack.c.bf16 %v281, %v281
    %297 = vmatprep.subr.bf16.mxu0 %v116
    %298 = vmatpush1.bf16.msra.mxu0 %v115
    %299 = vmatprep.subr.bf16.mxu0 %v118
    %300 = vmatpush1.bf16.msra.mxu0 %v117
    %301 = vmatprep.subr.bf16.mxu0 %v120
    %302 = vmatpush1.bf16.msra.mxu0 %v119
    %303 = vmatprep.subr.bf16.mxu0 %v122
    %304 = vmatpush1.bf16.msra.mxu0 %v121
    %305 = vmatprep.subr.bf16.mxu0 %v124
    %306 = vmatpush1.bf16.msra.mxu0 %v123
    %307 = vmatprep.subr.bf16.mxu0 %v126
    %308 = vmatpush1.bf16.msra.mxu0 %v125
    %309 = vmatprep.subr.bf16.mxu0 %v128
    %310 = vmatpush1.bf16.msra.mxu0 %v127
    %311 = vmatprep.subr.bf16.mxu0 %v130
    %312 = vmatpush1.bf16.msra.mxu0 %v129
    %313 = vmatprep.subr.bf16.mxu0 0
    %314 = vmatpush1.bf16.msra.mxu0 0
    %315 = vmatprep.subr.bf16.mxu0 0
    %316 = vmatpush1.bf16.msra.mxu0 0
    %317 = vmatprep.subr.bf16.mxu0 0
    %318 = vmatpush1.bf16.msra.mxu0 0
    %319 = vmatprep.subr.bf16.mxu0 0
    %320 = vmatpush1.bf16.msra.mxu0 0
    %321 = vmatprep.subr.bf16.mxu0 0
    %322 = vmatpush1.bf16.msra.mxu0 0
    %323 = vmatprep.subr.bf16.mxu0 0
    %324 = vmatpush1.bf16.msra.mxu0 0
    %325 = vmatprep.subr.bf16.mxu0 0
    %326 = vmatpush1.bf16.msra.mxu0 0
    %327 = vmatprep.subr.bf16.mxu0 0
    %328 = vmatpush1.bf16.msra.mxu0 0
    %329 = vmatprep.mubr.bf16.mxu0 0
    %330 = vmatmul.mubr.bf16.gmra.mrb[0].mxu0 %v296
    %v331 = vpop.f32.mrb[0].mxu0
    %v332 = vadd.f32 0.0, %v331
    %v333 = vpop.f32.mrb[0].mxu0
    %v334 = vadd.f32 0.0, %v333
    %v335 = vpop.f32.mrb[0].mxu0
    %v336 = vpop.f32.mrb[0].mxu0
    %337 = vdwg.mxu0
    %v340 = vcombine.low %v332, %v334
    %v342 = vunpack.c.l.s4 1966171168
    %v343 = vunpack.c.0.s8 %v342
    %v344 = vlaneseq
    %v345 = vshrl.u32 %v344, 7
    %v346 = vsub.s32 %v343, %v345
    %v347 = vrot.slane %v340, %v346
    %v349 = vunpack.c.l.s4 1966171168
    %v350 = vunpack.c.0.s8 %v349
    %v351 = vlaneseq
    %v352 = vshrl.u32 %v351, 7
    %v353 = vsub.s32 %v350, %v352
    %v354 = vrot.slane %v347, %v353
    %v356 = vadd.f32 %v295, %v354
    %s357 = sld [smem:[#allocation2 + $0x3]]
    %p358 = scmp.gt.s32.totalorder %s357, 0
    %s359 = scalar_select %p358, %s357, 0
    %p360 = scmp.lt.s32.totalorder %s359, 55
    %s361 = scalar_select %p360, %s359, 55
    %s362 = sshra.s32 %s361, 3
    %s363 = sand.u32 %s361, 7
    %s364 = sshra.s32 %s361, 3
    %s365 = sand.u32 %s361, 7
    %s366 = smul.u32 %s362, 2
    %s367 = smul.u32 %s366, 8
    %s368 = sadd.s32 %s367, %s365
    %s369 = scalar_lea.vmem %s2, %s368
    %v370 = vld [vmem:[%s369] ss:$8 sm:$0x3]
    %v371 = vpack.c.bf16 %v356, %v356
    %372 = vmatprep.subr.bf16.mxu0 %v116
    %373 = vmatpush1.bf16.msra.mxu0 %v115
    %374 = vmatprep.subr.bf16.mxu0 %v118
    %375 = vmatpush1.bf16.msra.mxu0 %v117
    %376 = vmatprep.subr.bf16.mxu0 %v120
    %377 = vmatpush1.bf16.msra.mxu0 %v119
    %378 = vmatprep.subr.bf16.mxu0 %v122
    %379 = vmatpush1.bf16.msra.mxu0 %v121
    %380 = vmatprep.subr.bf16.mxu0 %v124
    %381 = vmatpush1.bf16.msra.mxu0 %v123
    %382 = vmatprep.subr.bf16.mxu0 %v126
    %383 = vmatpush1.bf16.msra.mxu0 %v125
    %384 = vmatprep.subr.bf16.mxu0 %v128
    %385 = vmatpush1.bf16.msra.mxu0 %v127
    %386 = vmatprep.subr.bf16.mxu0 %v130
    %387 = vmatpush1.bf16.msra.mxu0 %v129
    %388 = vmatprep.subr.bf16.mxu0 0
    %389 = vmatpush1.bf16.msra.mxu0 0
    %390 = vmatprep.subr.bf16.mxu0 0
    %391 = vmatpush1.bf16.msra.mxu0 0
    %392 = vmatprep.subr.bf16.mxu0 0
    %393 = vmatpush1.bf16.msra.mxu0 0
    %394 = vmatprep.subr.bf16.mxu0 0
    %395 = vmatpush1.bf16.msra.mxu0 0
    %396 = vmatprep.subr.bf16.mxu0 0
    %397 = vmatpush1.bf16.msra.mxu0 0
    %398 = vmatprep.subr.bf16.mxu0 0
    %399 = vmatpush1.bf16.msra.mxu0 0
    %400 = vmatprep.subr.bf16.mxu0 0
    %401 = vmatpush1.bf16.msra.mxu0 0
    %402 = vmatprep.subr.bf16.mxu0 0
    %403 = vmatpush1.bf16.msra.mxu0 0
    %404 = vmatprep.mubr.bf16.mxu0 0
    %405 = vmatmul.mubr.bf16.gmra.mrb[0].mxu0 %v371
    %v406 = vpop.f32.mrb[0].mxu0
    %v407 = vadd.f32 0.0, %v406
    %v408 = vpop.f32.mrb[0].mxu0
    %v409 = vadd.f32 0.0, %v408
    %v410 = vpop.f32.mrb[0].mxu0
    %v411 = vpop.f32.mrb[0].mxu0
    %412 = vdwg.mxu0
    %v415 = vcombine.low %v407, %v409
    %v417 = vunpack.c.l.s4 1966171168
    %v418 = vunpack.c.0.s8 %v417
    %v419 = vlaneseq
    %v420 = vshrl.u32 %v419, 7
    %v421 = vsub.s32 %v418, %v420
    %v422 = vrot.slane %v415, %v421
    %v424 = vunpack.c.l.s4 1966171168
    %v425 = vunpack.c.0.s8 %v424
    %v426 = vlaneseq
    %v427 = vshrl.u32 %v426, 7
    %v428 = vsub.s32 %v425, %v427
    %v429 = vrot.slane %v422, %v428
    %v431 = vadd.f32 %v370, %v429
    %432 = vst [vmem:[#allocation6] sm:$0x1] %v431
    %v433 = vlaneseq
    %v434 = vand.u32 %v433, 127
    %vm435 = vcmp.lt.s32.totalorder %v434, 16
    %v437 = vlaneseq
    %v438 = vshrl.u32 %v437, 7
    %v439 = vsub.s32 1, %v438
    %v440 = vrot.slane %v431, %v439
    %v442 = vsel %vm435, %v440, -inf
    %vm443 = vcmask 1040384
    %v444 = vsel %vm443, %v442, -inf
    %445 = vmax.xlane.f32.xlu0 %v444
    %v446 = vpop.xlane.xlu0 %445
    %v447 = vsub.f32 %v442, %v446
    %v448 = vmul.f32 %v447, 1.442695
    %v449 = vpow.pop %v448
    %v450 = vsel %vm443, %v449, 0.0
    %451 = vadd.xlane.f32.xlu0 %v450
    %v452 = vpop.xlane.xlu0 %451
    %v453 = vlog2.pop %v452
    %v454 = vmul.f32 %v453, 0.6931472
    %v455 = vsub.f32 %v447, %v454
    %456 = vst [vmem:[#allocation5] sm:$0x1] %v455
    // Predicated region
    $region22: #{infer.1} parent=1 // pred_check
      _
    $region23: #{infer.1} parent=1 // pred_check_branch
      %458 = sbr.rel (0) target = $region25
    $region24: #{infer.1} parent=1 // pred_region
      %s460 = ssub.s32 16, 16
      %461 = vsyncadd [#allocation3], %s460
      %s463 = sshll.u32 [#allocation5], 4
      %s464 = int_to_ptr.vmem [resolvable:$true] %s463
      %466 = dma.vmem_to_hbm [thread:$0]  %s464, 16, %s4, [#allocation3]
    $region25: #{infer.1} parent=1 // pred_fallthru
      _
    // Predicated region
    $region26: #{infer.1} parent=1 // pred_check
      _
    $region27: #{infer.1} parent=1 // pred_check_branch
      %468 = sbr.rel (0) target = $region29
    $region28: #{infer.1} parent=1 // pred_region
      %s470 = ssub.s32 16, 16
      %471 = vsyncadd [#allocation7], %s470
      %s473 = sshll.u32 [#allocation6], 4
      %s474 = int_to_ptr.vmem [resolvable:$true] %s473
      %476 = dma.vmem_to_hbm [thread:$0]  %s474, 16, %s5, [#allocation7]
    $region29: #{infer.1} parent=1 // pred_fallthru
      _
    // Predicated region
    $region30: #{infer.1} parent=1 // pred_check
      _
    $region31: #{infer.1} parent=1 // pred_check_branch
      %478 = sbr.rel (0) target = $region33
    $region32: #{infer.1} parent=1 // pred_region
      %479 = dma.done [#allocation3], 16
    $region33: #{infer.1} parent=1 // pred_fallthru
      _
    // Predicated region
    $region34: #{infer.1} parent=1 // pred_check
      _
    $region35: #{infer.1} parent=1 // pred_check_branch
      %481 = sbr.rel (0) target = $region37
    $region36: #{infer.1} parent=1 // pred_region
      %482 = dma.done [#allocation7], 16
    $region37: #{infer.1} parent=1 // pred_fallthru
      _
    %483 = vsyncpa [#allocation3], 1
    %484 = vsyncpa [#allocation7], 1
    %485 = vsyncpa [#allocation4], 1

</llo_original>
